<compile_context>
chip_gen: v6e
topology: v6e:2x2x1
jax: 0.10.0
libtpu: 0.0.40
codegen_flags: <defaults>
</compile_context>

<pallas_src>
import functools

import jax
import jax.numpy as jnp
from jax.experimental import pallas as pl
from jax.experimental.pallas import tpu as pltpu


def _round_up(v, m):
    return ((v + m - 1) // m) * m


def _scoped_vmem_cap_bytes():
    """Generation-aware scoped-VMEM cap (conservative on v7x's 64 MiB VMEM)."""
    phys = 64 << 20  # conservative default if the hardware query is unavailable
    try:
        phys = int(pltpu.get_tpu_info().vmem_capacity_bytes)
    except Exception:
        pass
    if phys <= (64 << 20):   # v7x-class: leave headroom for compiler scratch/semaphores
        return 28 << 20
    return 80 << 20          # v5e/v6e-class (128 MiB physical)


# --------------------------------------------------------------------------- #
# Fused single-pass kernel: whole (C, S) slab per batch element is resident.   #
# --------------------------------------------------------------------------- #
def _fused_kernel(x_ref, w1_ref, w2_ref, o_ref, *, inv_s):
    x = x_ref[...]                                         # (C, S), native dtype
    xf = x.astype(jnp.float32)
    avg = jnp.sum(xf, axis=-1, keepdims=True) * inv_s      # (C, 1)
    mx = jnp.max(xf, axis=-1, keepdims=True)               # (C, 1)

    # Stack avg/max as two columns -> one batched FC pass for both pooled vecs.
    col = jax.lax.broadcasted_iota(jnp.int32, (avg.shape[0], 2), 1)
    pooled = jnp.where(col == 0, avg, mx)                  # (C, 2)
    w1 = w1_ref[...].astype(jnp.float32)                   # (Cr, C)
    w2 = w2_ref[...].astype(jnp.float32)                   # (C, Cr)
    h = jnp.maximum(jnp.dot(w1, pooled, preferred_element_type=jnp.float32), 0.0)
    out = jnp.dot(w2, h, preferred_element_type=jnp.float32)
    att = jax.nn.sigmoid(out[:, 0:1] + out[:, 1:2])        # (C, 1), f32

    o_ref[...] = (xf * att).astype(o_ref.dtype)


# --------------------------------------------------------------------------- #
# Two-pass path: pass 1 = pooling + FC + sigmoid, pass 2 = broadcast multiply. #
# --------------------------------------------------------------------------- #
def _pool_fc_kernel(x_ref, w1_ref, w2_ref, att_ref, sum_sc, max_sc,
                    *, true_s, s_tile):
    """Accumulate global sum/max over spatial tiles of one batch element, then
    run the squeeze/excite FC + sigmoid on the last tile.

    x_ref:   (C, s_tile) input tile (native dtype, ragged edge block possible)
    w1_ref:  (Cr, C)     Conv3d(C, C/r, 1).weight with spatial dims squeezed
    w2_ref:  (C, Cr)     Conv3d(C/r, C, 1).weight with spatial dims squeezed
    att_ref: (C, 1)      per-channel attention (float32), written on last tile
    sum_sc / max_sc: (C, 1) float32 running accumulators
    """
    s_idx = pl.program_id(1)
    num_s = pl.num_programs(1)

    @pl.when(s_idx == 0)
    def _init():
        sum_sc[...] = jnp.zeros(sum_sc.shape, sum_sc.dtype)
        max_sc[...] = jnp.full(max_sc.shape, -jnp.inf, max_sc.dtype)

    x = x_ref[...]                                          # (C, s_tile)
    ones = jnp.ones((s_tile, 1), dtype=x.dtype)
    rem = true_s % s_tile                                   # static Python int

    def accumulate(x_sum, x_max):
        # Cross-lane sum goes through the otherwise-idle MXU; only the max
        # needs an XLU cross-lane reduce.
        sum_sc[...] += jnp.dot(x_sum, ones, preferred_element_type=jnp.float32)
        max_sc[...] = jnp.maximum(
            max_sc[...],
            jnp.max(x_max, axis=-1, keepdims=True).astype(jnp.float32))

    if rem == 0:
        # All tiles are full: no masking anywhere.
        accumulate(x, x)
    else:
        is_edge = s_idx == num_s - 1

        @pl.when(s_idx != num_s - 1)
        def _full_tile():
            accumulate(x, x)

        @pl.when(is_edge)
        def _edge_tile():
            # Partial edge block (no host-side padding): lanes >= rem contain
            # garbage, so mask them out of BOTH the sum and the max.
            lane = jax.lax.broadcasted_iota(jnp.int32, x.shape, 1)
            valid = lane < rem
            accumulate(jnp.where(valid, x, jnp.zeros_like(x)),
                       jnp.where(valid, x, jnp.full_like(x, -jnp.inf)))

    @pl.when(s_idx == num_s - 1)
    def _finalize():
        avg = sum_sc[...] * (1.0 / true_s)                  # (C, 1)
        mx = max_sc[...]                                    # (C, 1)
        col = jax.lax.broadcasted_iota(jnp.int32, (avg.shape[0], 2), 1)
        pooled = jnp.where(col == 0, avg, mx)               # (C, 2)
        w1 = w1_ref[...].astype(jnp.float32)                # (Cr, C)
        w2 = w2_ref[...].astype(jnp.float32)                # (C, Cr)
        h = jnp.maximum(
            jnp.dot(w1, pooled, preferred_element_type=jnp.float32), 0.0)   # (Cr, 2)
        out = jnp.dot(w2, h, preferred_element_type=jnp.float32)            # (C, 2)
        att_ref[...] = jax.nn.sigmoid(out[:, 0:1] + out[:, 1:2])            # (C, 1)


def _scale_kernel(x_ref, att_ref, o_ref):
    """y = x * att, f32 multiply (matches reference), lane-dense store."""
    att = att_ref[...]                                      # (C, 1), f32
    o_ref[...] = (x_ref[...].astype(jnp.float32) * att).astype(o_ref.dtype)


# --------------------------------------------------------------------------- #
# Wrapper                                                                      #
# --------------------------------------------------------------------------- #
def channel_attention(x, w1, w2, *, block_bytes=None, allow_fused=True):
    """x: (N, C, D, H, W); w1: (C//r, C); w2: (C, C//r). Returns x's shape/dtype.

    block_bytes: optional per-block byte target for the two-pass path (tuning/tests).
    allow_fused: disable the single-pass fused path (tests the streaming path).
    """
    N, C, D, H, W = x.shape
    S = D * H * W
    Cr = w1.shape[0]
    itemsize = jnp.dtype(x.dtype).itemsize
    x_flat = x.reshape(N, C, S)

    scoped_cap = _scoped_vmem_cap_bytes()
    weight_bytes = int(w1.size * jnp.dtype(w1.dtype).itemsize
                       + w2.size * jnp.dtype(w2.dtype).itemsize)
    slack = 2 << 20

    # ---- fused single-pass path: whole (C, S) slab resident per batch element ----
    slab_bytes = C * S * itemsize
    # 2x in + 2x out (double-buffered) + one f32 temp of the slab + weights + slack.
    fused_need = 4 * slab_bytes + C * S * 4 + 2 * weight_bytes + slack
    if allow_fused and fused_need <= scoped_cap:
        cost = pl.CostEstimate(
            flops=int(3 * N * C * S + 8 * N * C * Cr),
            transcendentals=int(N * C),
            bytes_accessed=int(2 * N * C * S * itemsize + 2 * weight_bytes),
        )
        y = pl.pallas_call(
            functools.partial(_fused_kernel, inv_s=1.0 / S),
            out_shape=jax.ShapeDtypeStruct((N, C, S), x.dtype),
            grid_spec=pltpu.PrefetchScalarGridSpec(
                num_scalar_prefetch=0,
                grid=(N,),
                in_specs=[
                    pl.BlockSpec((None, C, S), lambda n: (n, 0, 0)),
                    pl.BlockSpec((Cr, C), lambda n: (0, 0)),
                    pl.BlockSpec((C, Cr), lambda n: (0, 0)),
                ],
                out_specs=pl.BlockSpec((None, C, S), lambda n: (n, 0, 0)),
            ),
            compiler_params=pltpu.CompilerParams(
                dimension_semantics=("parallel",),
                vmem_limit_bytes=int(min(scoped_cap, max(fused_need, 8 << 20))),
            ),
            cost_estimate=cost,
        )(x_flat, w1, w2)
        return y.reshape(N, C, D, H, W)

    # ---- two-pass path: byte-budgeted, lane-dense spatial tiles (no padding) ----
    target = block_bytes if block_bytes is not None else (2 << 20)   # ~2 MiB/block
    # Keep 4 double-buffered blocks + weights under the scoped cap; never below
    # one 128-lane column.
    fit = max(C * 128 * itemsize, (scoped_cap - slack - 2 * weight_bytes) // 4)
    per_block = max(C * 128 * itemsize, min(target, fit))
    s_tile = max(128, (per_block // (C * itemsize)) // 128 * 128)
    s_tile = min(s_tile, _round_up(S, 128))
    num_s = pl.cdiv(S, s_tile)
    tile_bytes = C * s_tile * itemsize
    vmem_limit = int(min(scoped_cap,
                         max(4 * tile_bytes + 2 * weight_bytes + slack, 8 << 20)))

    # ---- pass 1: global avg/max pooling + FC + sigmoid -> att (N, C, 1) f32 ----
    pool_cost = pl.CostEstimate(
        flops=int(3 * N * C * S + 8 * N * C * Cr),
        transcendentals=int(N * C),
        bytes_accessed=int(N * C * S * itemsize + 2 * weight_bytes + N * C * 4),
    )
    att = pl.pallas_call(
        functools.partial(_pool_fc_kernel, true_s=S, s_tile=s_tile),
        out_shape=jax.ShapeDtypeStruct((N, C, 1), jnp.float32),
        grid_spec=pltpu.PrefetchScalarGridSpec(
            num_scalar_prefetch=0,
            grid=(N, num_s),
            in_specs=[
                pl.BlockSpec((None, C, s_tile), lambda n, s: (n, 0, s)),
                pl.BlockSpec((Cr, C), lambda n, s: (0, 0)),
                pl.BlockSpec((C, Cr), lambda n, s: (0, 0)),
            ],
            out_specs=pl.BlockSpec((None, C, 1), lambda n, s: (n, 0, 0)),
            scratch_shapes=[
                pltpu.VMEM((C, 1), jnp.float32),   # running sum
                pltpu.VMEM((C, 1), jnp.float32),   # running max
            ],
        ),
        compiler_params=pltpu.CompilerParams(
            dimension_semantics=("parallel", "arbitrary"),
            vmem_limit_bytes=vmem_limit,
        ),
        cost_estimate=pool_cost,
    )(x_flat, w1, w2)
    # TODO(synk): on v7x, pass 1 for batch-1 shapes could additionally split the
    # spatial range across the two TensorCores (partial sums combined outside).

    # ---- pass 2: lane-dense broadcast multiply y = x * att ----
    scale_cost = pl.CostEstimate(
        flops=int(N * C * S),
        transcendentals=0,
        bytes_accessed=int(2 * N * C * S * itemsize + N * C * 4),
    )
    y = pl.pallas_call(
        _scale_kernel,
        out_shape=jax.ShapeDtypeStruct((N, C, S), x.dtype),
        grid_spec=pltpu.PrefetchScalarGridSpec(
            num_scalar_prefetch=0,
            grid=(N, num_s),
            in_specs=[
                pl.BlockSpec((None, C, s_tile), lambda n, s: (n, 0, s)),
                pl.BlockSpec((None, C, 1), lambda n, s: (n, 0, 0)),
            ],
            out_specs=pl.BlockSpec((None, C, s_tile), lambda n, s: (n, 0, s)),
        ),
        compiler_params=pltpu.CompilerParams(
            dimension_semantics=("parallel", "parallel"),
            vmem_limit_bytes=vmem_limit,
        ),
        cost_estimate=scale_cost,
    )(x_flat, att)

    return y.reshape(N, C, D, H, W)


def channel_attention_ref(x, w1, w2):
    """Pure-JAX reference matching the PyTorch forward."""
    xf = x.astype(jnp.float32)
    avg = jnp.mean(xf, axis=(2, 3, 4))                      # (N, C)
    mx = jnp.max(xf, axis=(2, 3, 4))                        # (N, C)

    def fc(v):
        h = jnp.maximum(v @ w1.T.astype(jnp.float32), 0.0)
        return h @ w2.T.astype(jnp.float32)

    att = jax.nn.sigmoid(fc(avg) + fc(mx))                  # (N, C)
    return (xf * att[:, :, None, None, None]).astype(x.dtype)


if __name__ == "__main__":
    key = jax.random.PRNGKey(0)

    def check(y, y_ref, name):
        assert y.shape == y_ref.shape, f"shape mismatch ({name})"
        assert jnp.allclose(y, y_ref, atol=1e-5, rtol=1e-5), \
            f"mismatch vs reference ({name})"

    # Test 1: fused single-pass path (whole slab fits VMEM). channel=32, r=16.
    N, C, D, H, W = 2, 32, 4, 4, 4
    Cr = C // 16
    kx, k1, k2, key = jax.random.split(key, 4)
    x = jax.random.normal(kx, (N, C, D, H, W), dtype=jnp.float32)
    w1 = jax.random.normal(k1, (Cr, C), dtype=jnp.float32) * 0.1   # Conv3d(C, C//r, 1).weight
    w2 = jax.random.normal(k2, (C, Cr), dtype=jnp.float32) * 0.1   # Conv3d(C//r, C, 1).weight
    y = jax.block_until_ready(channel_attention(x, w1, w2))
    check(y, channel_attention_ref(x, w1, w2), "fused single-pass")

    # Test 2: two-pass path with multiple spatial tiles and a ragged edge tile
    # (S = 320, s_tile = 128 -> 3 tiles; last tile has 64 valid lanes).
    N2, C2 = 1, 32
    Cr2 = C2 // 16
    kx, k1, k2, key = jax.random.split(key, 4)
    x2 = jax.random.normal(kx, (N2, C2, 8, 8, 5), dtype=jnp.float32)
    w1b = jax.random.normal(k1, (Cr2, C2), dtype=jnp.float32) * 0.1
    w2b = jax.random.normal(k2, (C2, Cr2), dtype=jnp.float32) * 0.1
    y2 = jax.block_until_ready(
        channel_attention(x2, w1b, w2b, allow_fused=False,
                          block_bytes=C2 * 128 * 4))
    check(y2, channel_attention_ref(x2, w1b, w2b), "two-pass ragged edge")

    # Test 3: two-pass path, spatial size an exact multiple of the tile
    # (S = 256, s_tile = 128 -> 2 full tiles, no edge masking path).
    kx, key = jax.random.split(key)
    x3 = jax.random.normal(kx, (N2, C2, 4, 8, 8), dtype=jnp.float32)
    y3 = jax.block_until_ready(
        channel_attention(x3, w1b, w2b, allow_fused=False,
                          block_bytes=C2 * 128 * 4))
    check(y3, channel_attention_ref(x3, w1b, w2b), "two-pass exact tiles")

    print("KERNEL_OK")
</pallas_src>

<mosaic_0001>
module attributes {stable_mosaic.version = 11 : i64} {
  func.func @_fused_kernel(%arg0: i32, %arg1: memref<1x32x64xf32, #tpu.memory_space<vmem>>, %arg2: memref<2x32xf32, #tpu.memory_space<vmem>>, %arg3: memref<32x2xf32, #tpu.memory_space<vmem>>, %arg4: memref<1x32x64xf32, #tpu.memory_space<vmem>>) attributes {dimension_semantics = [#tpu.dimension_semantics<parallel>], iteration_bounds = array<i64: 2>, scalar_prefetch = 0 : i64, scratch_operands = 0 : i64, tpu.core_type = #tpu.core_type<tc>, window_params = [{transform_indices = @transform_0, window_bounds = array<i64: 1, 32, 64>}, {pipeline_mode = #tpu.pipeline_mode<synchronous>, transform_indices = @transform_1, window_bounds = array<i64: 2, 32>}, {pipeline_mode = #tpu.pipeline_mode<synchronous>, transform_indices = @transform_2, window_bounds = array<i64: 32, 2>}, {transform_indices = @transform_3, window_bounds = array<i64: 1, 32, 64>}]} {
    %c0 = arith.constant 0 : index
    %c0_0 = arith.constant 0 : index
    %c0_1 = arith.constant 0 : index
    %0 = vector.load %arg1[%c0, %c0_0, %c0_1] : memref<1x32x64xf32, #tpu.memory_space<vmem>>, vector<1x32x64xf32>
    %1 = vector.shape_cast %0 : vector<1x32x64xf32> to vector<32x64xf32>
    %cst = arith.constant dense<0.000000e+00> : vector<32xf32>
    %2 = vector.multi_reduction <add>, %1, %cst [1] : vector<32x64xf32> to vector<32xf32>
    %3 = vector.shape_cast %2 : vector<32xf32> to vector<32x1xf32>
    %cst_2 = arith.constant 1.562500e-02 : f32
    %4 = vector.broadcast %cst_2 : f32 to vector<32x1xf32>
    %5 = arith.mulf %3, %4 : vector<32x1xf32>
    %cst_3 = arith.constant dense<0xFF800000> : vector<32xf32>
    %6 = vector.multi_reduction <maximumf>, %1, %cst_3 [1] : vector<32x64xf32> to vector<32xf32>
    %7 = vector.shape_cast %6 : vector<32xf32> to vector<32x1xf32>
    %8 = tpu.iota {dimensions = array<i32: 1>} : vector<32x2xi32>
    %c0_i32 = arith.constant 0 : i32
    %9 = vector.broadcast %c0_i32 : i32 to vector<32x2xi32>
    %10 = arith.cmpi eq, %8, %9 : vector<32x2xi32>
    %11 = vector.shape_cast %5 : vector<32x1xf32> to vector<32x1xf32>
    %12 = vector.broadcast %11 : vector<32x1xf32> to vector<32x2xf32>
    %13 = vector.shape_cast %7 : vector<32x1xf32> to vector<32x1xf32>
    %14 = vector.broadcast %13 : vector<32x1xf32> to vector<32x2xf32>
    %15 = arith.select %10, %12, %14 : vector<32x2xi1>, vector<32x2xf32>
    %c0_4 = arith.constant 0 : index
    %c0_5 = arith.constant 0 : index
    %16 = vector.load %arg2[%c0_4, %c0_5] : memref<2x32xf32, #tpu.memory_space<vmem>>, vector<2x32xf32>
    %c0_6 = arith.constant 0 : index
    %c0_7 = arith.constant 0 : index
    %17 = vector.load %arg3[%c0_6, %c0_7] : memref<32x2xf32, #tpu.memory_space<vmem>>, vector<32x2xf32>
    %cst_8 = arith.constant dense<0.000000e+00> : vector<2x2xf32>
    %18 = tpu.matmul %16, %15, %cst_8 {dimension_numbers = #tpu.dot_dimension_numbers<[1], [0], [0], [1], [0, 0, 1, 1], [], []>} : vector<2x32xf32>, vector<32x2xf32>, vector<2x2xf32> -> vector<2x2xf32>
    %cst_9 = arith.constant 0.000000e+00 : f32
    %19 = vector.broadcast %cst_9 : f32 to vector<2x2xf32>
    %20 = arith.maximumf %18, %19 : vector<2x2xf32>
    %cst_10 = arith.constant dense<0.000000e+00> : vector<32x2xf32>
    %21 = tpu.matmul %17, %20, %cst_10 {dimension_numbers = #tpu.dot_dimension_numbers<[1], [0], [0], [1], [0, 0, 1, 1], [], []>} : vector<32x2xf32>, vector<2x2xf32>, vector<32x2xf32> -> vector<32x2xf32>
    %22 = vector.extract_strided_slice %21 {offsets = [0, 0], sizes = [32, 1], strides = [1, 1]} : vector<32x2xf32> to vector<32x1xf32>
    %23 = vector.extract_strided_slice %21 {offsets = [0, 1], sizes = [32, 1], strides = [1, 1]} : vector<32x2xf32> to vector<32x1xf32>
    %24 = arith.addf %22, %23 : vector<32x1xf32>
    %25 = arith.negf %24 : vector<32x1xf32>
    %26 = math.exp %25 : vector<32x1xf32>
    %cst_11 = arith.constant 1.000000e+00 : f32
    %27 = vector.broadcast %cst_11 : f32 to vector<32x1xf32>
    %28 = arith.addf %27, %26 : vector<32x1xf32>
    %29 = arith.divf %27, %28 : vector<32x1xf32>
    %30 = vector.broadcast %29 : vector<32x1xf32> to vector<32x64xf32>
    %31 = arith.mulf %1, %30 : vector<32x64xf32>
    %c0_12 = arith.constant 0 : index
    %c0_13 = arith.constant 0 : index
    %c0_14 = arith.constant 0 : index
    %32 = vector.load %arg4[%c0_12, %c0_13, %c0_14] : memref<1x32x64xf32, #tpu.memory_space<vmem>>, vector<1x32x64xf32>
    %33 = vector.shape_cast %32 : vector<1x32x64xf32> to vector<32x64xf32>
    %34 = vector.shape_cast %31 : vector<32x64xf32> to vector<1x32x64xf32>
    tpu.vector_store %arg4[%c0_12, %c0_13, %c0_14], %34 {strides = array<i32>} : memref<1x32x64xf32, #tpu.memory_space<vmem>>, vector<1x32x64xf32>,
    return
  }
  func.func @transform_0(%arg0: i32) -> (i32, i32, i32) {
    %c0_i32 = arith.constant 0 : i32
    %c0_i32_0 = arith.constant 0 : i32
    %c0_i32_1 = arith.constant 0 : i32
    return %arg0, %c0_i32, %c0_i32_0 : i32, i32, i32
  }
  func.func @transform_1(%arg0: i32) -> (i32, i32) {
    %c0_i32 = arith.constant 0 : i32
    %c0_i32_0 = arith.constant 0 : i32
    %c0_i32_1 = arith.constant 0 : i32
    return %c0_i32, %c0_i32_0 : i32, i32
  }
  func.func @transform_2(%arg0: i32) -> (i32, i32) {
    %c0_i32 = arith.constant 0 : i32
    %c0_i32_0 = arith.constant 0 : i32
    %c0_i32_1 = arith.constant 0 : i32
    return %c0_i32, %c0_i32_0 : i32, i32
  }
  func.func @transform_3(%arg0: i32) -> (i32, i32, i32) {
    %c0_i32 = arith.constant 0 : i32
    %c0_i32_0 = arith.constant 0 : i32
    %c0_i32_1 = arith.constant 0 : i32
    return %arg0, %c0_i32, %c0_i32_0 : i32, i32, i32
  }
}

</mosaic_0001>

<llo_original>
// kernel: tpu_custom_call.1
$region0: #{tpu_custom_call.1}
  #allocation0 [shape = 'u32[]', space=smem, size = 0x4, offset = 0x4, fixed_abs, tag = 'smem constant byte address 0x4 - core index']
  #allocation1 [shape = 'u32[144,128]{1,0:T(1,128)}', space=vmem, size = 0x12000, scoped, tag = 'internal scratch']
  %s0 = inlined_call_operand.hbm [shape: f32[2,32,64], index: 0, kind: input, shape index: {}]
  %s1 = inlined_call_operand.vmem [shape: f32[2,32], index: 1, kind: input, shape index: {}]
  %s2 = inlined_call_operand.vmem [shape: f32[32,2], index: 2, kind: input, shape index: {}]
  %s3 = inlined_call_operand.hbm [shape: f32[2,32,64], index: 3, kind: output, shape index: {}]
  %s4 = sld [smem:[#allocation0]]
  $region49: #{tpu_custom_call.1} parent=0
    _
  %s6 = ssub.s32 1, %s4
  %s7 = scalar_select 0, %s6, %s4
  $region1: #{tpu_custom_call.1} parent=0
    #allocation2 [shape = 'u8[32768]{0}', space=vmem, size = 0x8000, scoped, tag = 'input window, operand 0']
    #allocation3 [shape = 's32[2]{0}', space=sflag, size = 0x8, scoped, tag = 'scoped memory for tpu_custom_call.1']
    #allocation4 [shape = 's32[2]{0}', space=sflag, size = 0x8, scoped, tag = 'scoped memory for tpu_custom_call.1']
    #allocation5 [shape = 'u8[32768]{0}', space=vmem, size = 0x8000, scoped, tag = 'output window, operand 0']
    %8 = vsyncpa [#allocation3], 0
    %s9 = scalar_lea.sflag [#allocation3], 1
    %10 = vsyncpa %s9, 0
    %11 = vsyncpa [#allocation4], 0
    %s12 = scalar_lea.sflag [#allocation4], 1
    %13 = vsyncpa %s12, 0
    loop: start=0, step=1, limit=4
    $region2: #{tpu_custom_call.1} parent=1 // loop_pre_header
      _
    $region3: #{tpu_custom_call.1} parent=1 // loop_header
      %s15 = sphi 0, %s19
      %p16 = scmp.ge.s32.totalorder %s15, 4
      %s25 = sphi 0, %s27
      %s28 = sphi 0, %s25
      %s29 = sphi 0, %s28
      %s45 = sphi 0, %s29
      %s49 = sphi 0, %s49
      %s51 = sphi 0, %s49
      %s52 = sphi 0, %s51
      %s66 = sphi 0, %s52
      %s70 = sphi 0, %s70
      %s72 = sphi 0, %s70
      %s73 = sphi 0, %s72
      %s87 = sphi 0, %s73
      %s93 = sphi 0, %s95
      %s96 = sphi 0, %s93
      %s97 = sphi 0, %s96
      %s113 = sphi 0, %s97
    $region4: #{tpu_custom_call.1} parent=1 // loop_header_branch
      %18 = sbr.rel (%p16) target = $region8
    $region5: #{tpu_custom_call.1} parent=1 // loop_body
      %s20 = ssub.s32 %s15, 1
      %s21 = ssub.s32 %s15, 2
      %s22 = sadd.s32 %s15, 1
      %s23 = ssub.s32 %s15, %s22
      %p24 = scmp.eq.s32.totalorder %s23, 0
      %s26 = sadd.s32 %s25, 1
      %s27 = scalar_select %p24, %s25, %s26
      %p30 = pneg %p24
      %p31 = scmp.eq.s32.totalorder %s15, 1
      %p32 = por %p30, %p31
      %p33 = scmp.ne.s32.totalorder %s25, %s28
      %p34 = scmp.eq.s32.totalorder %s15, 0
      %p35 = por %p33, %p34
      %p36 = scmp.ne.s32.totalorder %s25, %s28
      %p37 = scmp.eq.s32.totalorder %s20, 1
      %p38 = por %p36, %p37
      %p39 = scmp.ne.s32.totalorder %s28, %s29
      %p40 = scmp.eq.s32.totalorder %s20, 0
      %p41 = por %p39, %p40
      %p42 = scmp.ne.s32.totalorder %s28, %s29
      %p43 = scmp.eq.s32.totalorder %s21, 1
      %p44 = por %p42, %p43
      %p46 = scmp.ne.s32.totalorder %s29, %s45
      %p47 = scmp.eq.s32.totalorder %s21, 0
      %p48 = por %p46, %p47
      %s50 = sadd.s32 %s49, 1
      %p53 = scmp.eq.s32.totalorder %s15, 1
      %p54 = scmp.ne.s32.totalorder %s49, %s51
      %p55 = scmp.eq.s32.totalorder %s15, 0
      %p56 = por %p54, %p55
      %p57 = scmp.ne.s32.totalorder %s49, %s51
      %p58 = scmp.eq.s32.totalorder %s20, 1
      %p59 = por %p57, %p58
      %p60 = scmp.ne.s32.totalorder %s51, %s52
      %p61 = scmp.eq.s32.totalorder %s20, 0
      %p62 = por %p60, %p61
      %p63 = scmp.ne.s32.totalorder %s51, %s52
      %p64 = scmp.eq.s32.totalorder %s21, 1
      %p65 = por %p63, %p64
      %p67 = scmp.ne.s32.totalorder %s52, %s66
      %p68 = scmp.eq.s32.totalorder %s21, 0
      %p69 = por %p67, %p68
      %s71 = sadd.s32 %s70, 1
      %p74 = scmp.eq.s32.totalorder %s15, 1
      %p75 = scmp.ne.s32.totalorder %s70, %s72
      %p76 = scmp.eq.s32.totalorder %s15, 0
      %p77 = por %p75, %p76
      %p78 = scmp.ne.s32.totalorder %s70, %s72
      %p79 = scmp.eq.s32.totalorder %s20, 1
      %p80 = por %p78, %p79
      %p81 = scmp.ne.s32.totalorder %s72, %s73
      %p82 = scmp.eq.s32.totalorder %s20, 0
      %p83 = por %p81, %p82
      %p84 = scmp.ne.s32.totalorder %s72, %s73
      %p85 = scmp.eq.s32.totalorder %s21, 1
      %p86 = por %p84, %p85
      %p88 = scmp.ne.s32.totalorder %s73, %s87
      %p89 = scmp.eq.s32.totalorder %s21, 0
      %p90 = por %p88, %p89
      %s91 = ssub.s32 %s15, %s22
      %p92 = scmp.eq.s32.totalorder %s91, 0
      %s94 = sadd.s32 %s93, 1
      %s95 = scalar_select %p92, %s93, %s94
      %p98 = pneg %p92
      %p99 = scmp.eq.s32.totalorder %s15, 1
      %p100 = por %p98, %p99
      %p101 = scmp.ne.s32.totalorder %s93, %s96
      %p102 = scmp.eq.s32.totalorder %s15, 0
      %p103 = por %p101, %p102
      %p104 = scmp.ne.s32.totalorder %s93, %s96
      %p105 = scmp.eq.s32.totalorder %s20, 1
      %p106 = por %p104, %p105
      %p107 = scmp.ne.s32.totalorder %s96, %s97
      %p108 = scmp.eq.s32.totalorder %s20, 0
      %p109 = por %p107, %p108
      %p110 = scmp.ne.s32.totalorder %s96, %s97
      %p111 = scmp.eq.s32.totalorder %s21, 1
      %p112 = por %p110, %p111
      %p114 = scmp.ne.s32.totalorder %s97, %s113
      %p115 = scmp.eq.s32.totalorder %s21, 0
      %p116 = por %p114, %p115
      %p117 = scmp.le.s32.totalorder 1, %s15
      %p118 = scmp.lt.s32.totalorder %s15, 3
      %p119 = pnand %p117, %p118
      %p120 = pneg %p119
      // Predicated region
      $region9: #{tpu_custom_call.1} parent=5 // pred_check
        _
      $region10: #{tpu_custom_call.1} parent=5 // pred_check_branch
        %122 = sbr.rel (%p119) target = $region12
      $region11: #{tpu_custom_call.1} parent=5 // pred_region
        %s123 = ssub.s32 %s15, 1
        // Predicated region
        $region13: #{tpu_custom_call.1} parent=11 // pred_check
          %p124 = pneg %p62
        $region14: #{tpu_custom_call.1} parent=11 // pred_check_branch
          %126 = sbr.rel (%p124) target = $region16
        $region15: #{tpu_custom_call.1} parent=11 // pred_region
          _
        $region16: #{tpu_custom_call.1} parent=11 // pred_fallthru
          _
        // Predicated region
        $region17: #{tpu_custom_call.1} parent=11 // pred_check
          %p127 = pneg %p83
        $region18: #{tpu_custom_call.1} parent=11 // pred_check_branch
          %129 = sbr.rel (%p127) target = $region20
        $region19: #{tpu_custom_call.1} parent=11 // pred_region
          _
        $region20: #{tpu_custom_call.1} parent=11 // pred_fallthru
          _
      $region12: #{tpu_custom_call.1} parent=5 // pred_fallthru
        _
      %p130 = scmp.lt.s32.totalorder %s15, 2
      // Predicated region
      $region21: #{tpu_custom_call.1} parent=5 // pred_check
        %p131 = pneg %p130
      $region22: #{tpu_custom_call.1} parent=5 // pred_check_branch
        %133 = sbr.rel (%p131) target = $region24
      $region23: #{tpu_custom_call.1} parent=5 // pred_region
        // Predicated region
        $region25: #{tpu_custom_call.1} parent=23 // pred_check
          %p134 = pneg %p35
        $region26: #{tpu_custom_call.1} parent=23 // pred_check_branch
          %136 = sbr.rel (%p134) target = $region28
        $region27: #{tpu_custom_call.1} parent=23 // pred_region
          %s137 = sand.u32 %s25, 1
          %s138 = scalar_lea.sflag [#allocation3], %s137
          %s139 = sand.u32 %s25, 1
          %s140 = smul.addr %s139, 32
          %s141 = scalar_lea.vmem [#allocation2], %s140
          %s143 = ssub.s32 512, 512
          %144 = vsyncadd %s138, %s143
          %s145 = smul.addr %s15, 4
          %s146 = smul.addr %s145, 128
          %s147 = scalar_lea.hbm %s0, %s146
          %s148 = sshll.u32 %s141, 4
          %s149 = int_to_ptr.vmem [resolvable:$true] %s148
          %154 = dma.hbm_to_vmem [thread:$0]  %s147, 512, %s149, %s138, 128, 128, 8
        $region28: #{tpu_custom_call.1} parent=23 // pred_fallthru
          _
      $region24: #{tpu_custom_call.1} parent=5 // pred_fallthru
        _
      %p155 = scmp.le.s32.totalorder 1, %s15
      %p156 = scmp.lt.s32.totalorder %s15, 3
      %p157 = pnand %p155, %p156
      %p158 = pneg %p157
      // Predicated region
      $region29: #{tpu_custom_call.1} parent=5 // pred_check
        _
      $region30: #{tpu_custom_call.1} parent=5 // pred_check_branch
        %160 = sbr.rel (%p157) target = $region32
      $region31: #{tpu_custom_call.1} parent=5 // pred_region
        %s161 = ssub.s32 %s15, 1
        %s162 = sand.u32 %s28, 1
        %s163 = scalar_lea.sflag [#allocation3], %s162
        %s164 = sand.u32 %s28, 1
        %s165 = smul.addr %s164, 32
        %s166 = scalar_lea.vmem [#allocation2], %s165
        // Predicated region
        $region33: #{tpu_custom_call.1} parent=31 // pred_check
          %p167 = pneg %p41
        $region34: #{tpu_custom_call.1} parent=31 // pred_check_branch
          %169 = sbr.rel (%p167) target = $region36
        $region35: #{tpu_custom_call.1} parent=31 // pred_region
          %170 = dma.done %s163, 512
        $region36: #{tpu_custom_call.1} parent=31 // pred_fallthru
          _
        %s171 = sand.u32 %s28, 1
        %s172 = scalar_lea.sflag [#allocation3], %s171
        %s173 = sand.u32 %s28, 1
        %s174 = smul.addr %s173, 32
        %s175 = scalar_lea.vmem [#allocation2], %s174
        %p176 = pneg %p41
        %p177 = pneg %p38
        %p178 = pneg %p62
        %p179 = pneg %p59
        %p180 = pneg %p83
        %p181 = pneg %p80
        %p182 = pneg %p109
        %p183 = pneg %p106
        %s184 = sand.u32 %s96, 1
        %s185 = scalar_lea.sflag [#allocation4], %s184
        %s186 = sand.u32 %s96, 1
        %s187 = smul.addr %s186, 32
        %s188 = scalar_lea.vmem [#allocation5], %s187
        %v189 = vld [vmem:[%s166] sm:$0xff]
        %v190 = vld [vmem:[%s166 + $0x8] sm:$0xff]
        %v191 = vld [vmem:[%s166 + $0x10] sm:$0xff]
        %v192 = vld [vmem:[%s166 + $0x18] sm:$0xff]
        %vm193 = vcmask 523264
        %v194 = vsel %vm193, %v189, 0.0
        %195 = vadd.xlane.f32.xlu0 %v194
        %v196 = vpop.xlane.xlu0 %195
        %v197 = vsel %vm193, %v190, 0.0
        %198 = vadd.xlane.f32.xlu0 %v197
        %v199 = vpop.xlane.xlu0 %198
        %v200 = vsel %vm193, %v191, 0.0
        %201 = vadd.xlane.f32.xlu0 %v200
        %v202 = vpop.xlane.xlu0 %201
        %v203 = vsel %vm193, %v192, 0.0
        %204 = vadd.xlane.f32.xlu0 %v203
        %v205 = vpop.xlane.xlu0 %204
        %v206 = vmul.f32 %v196, 0.015625
        %v207 = vmul.f32 %v199, 0.015625
        %v208 = vmul.f32 %v202, 0.015625
        %v209 = vmul.f32 %v205, 0.015625
        %v210 = vsel %vm193, %v189, -inf
        %211 = vmax.xlane.f32.xlu0 %v210
        %v212 = vpop.xlane.xlu0 %211
        %v213 = vsel %vm193, %v190, -inf
        %214 = vmax.xlane.f32.xlu0 %v213
        %v215 = vpop.xlane.xlu0 %214
        %v216 = vsel %vm193, %v191, -inf
        %217 = vmax.xlane.f32.xlu0 %v216
        %v218 = vpop.xlane.xlu0 %217
        %v219 = vsel %vm193, %v192, -inf
        %220 = vmax.xlane.f32.xlu0 %v219
        %v221 = vpop.xlane.xlu0 %220
        %v222 = vlaneseq
        %v223 = vand.u32 %v222, 127
        %vm224 = vcmp.eq.s32.totalorder %v223, 0
        %v225 = vsel %vm224, %v206, %v212
        %v226 = vsel %vm224, %v207, %v215
        %v227 = vsel %vm224, %v208, %v218
        %v228 = vsel %vm224, %v209, %v221
        %v229 = vld [vmem:[%s1] sm:$0x3]
        %v230 = vld [vmem:[%s2] sm:$0xff]
        %v231 = vld [vmem:[%s2 + $0x8] sm:$0xff]
        %v232 = vld [vmem:[%s2 + $0x10] sm:$0xff]
        %v233 = vld [vmem:[%s2 + $0x18] sm:$0xff]
        %vm234 = vcmask 261120
        %v236 = vsel %vm234, %v229, 0
        %238 = vmatprep.subr.mxu0 0.0
        %239 = vmatpush1.msra.mxu0 0.0
        %240 = vmatprep.subr.mxu0 0.0
        %241 = vmatpush1.msra.mxu0 0.0
        %242 = vmatprep.subr.mxu0 0.0
        %243 = vmatpush1.msra.mxu0 0.0
        %244 = vmatprep.subr.mxu0 0.0
        %245 = vmatpush1.msra.mxu0 0.0
        %246 = vmatprep.subr.mxu0 0.0
        %247 = vmatpush1.msra.mxu0 0.0
        %248 = vmatprep.subr.mxu0 0.0
        %249 = vmatpush1.msra.mxu0 0.0
        %250 = vmatprep.subr.mxu0 0.0
        %251 = vmatpush1.msra.mxu0 0.0
        %252 = vmatprep.subr.mxu0 0.0
        %253 = vmatpush1.msra.mxu0 0.0
        %254 = vmatprep.subr.mxu0 0.0
        %255 = vmatpush1.msra.mxu0 0.0
        %256 = vmatprep.subr.mxu0 0.0
        %257 = vmatpush1.msra.mxu0 0.0
        %258 = vmatprep.subr.mxu0 0.0
        %259 = vmatpush1.msra.mxu0 0.0
        %260 = vmatprep.subr.mxu0 0.0
        %261 = vmatpush1.msra.mxu0 0.0
        %262 = vmatprep.subr.mxu0 0.0
        %263 = vmatpush1.msra.mxu0 %v228
        %264 = vmatprep.subr.mxu0 0.0
        %265 = vmatpush1.msra.mxu0 %v227
        %266 = vmatprep.subr.mxu0 0.0
        %267 = vmatpush1.msra.mxu0 %v226
        %268 = vmatprep.subr.mxu0 0.0
        %269 = vmatpush1.msra.mxu0 %v225
        %270 = vmatprep.subr.mxu0 0.0
        %271 = vmatpush2.msra.mxu0 0.0
        %272 = vmatprep.subr.mxu0 0.0
        %273 = vmatpush2.msra.mxu0 0.0
        %274 = vmatprep.subr.mxu0 0.0
        %275 = vmatpush2.msra.mxu0 0.0
        %276 = vmatprep.subr.mxu0 0.0
        %277 = vmatpush2.msra.mxu0 0.0
        %278 = vmatprep.subr.mxu0 0.0
        %279 = vmatpush2.msra.mxu0 0.0
        %280 = vmatprep.subr.mxu0 0.0
        %281 = vmatpush2.msra.mxu0 0.0
        %282 = vmatprep.subr.mxu0 0.0
        %283 = vmatpush2.msra.mxu0 0.0
        %284 = vmatprep.subr.mxu0 0.0
        %285 = vmatpush2.msra.mxu0 0.0
        %286 = vmatprep.subr.mxu0 0.0
        %287 = vmatpush2.msra.mxu0 0.0
        %288 = vmatprep.subr.mxu0 0.0
        %289 = vmatpush2.msra.mxu0 0.0
        %290 = vmatprep.subr.mxu0 0.0
        %291 = vmatpush2.msra.mxu0 0.0
        %292 = vmatprep.subr.mxu0 0.0
        %293 = vmatpush2.msra.mxu0 0.0
        %294 = vmatprep.subr.mxu0 0.0
        %295 = vmatpush2.msra.mxu0 0.0
        %296 = vmatprep.subr.mxu0 0.0
        %297 = vmatpush2.msra.mxu0 0.0
        %298 = vmatprep.subr.mxu0 0.0
        %299 = vmatpush2.msra.mxu0 0.0
        %300 = vmatprep.subr.mxu0 0.0
        %301 = vmatpush2.msra.mxu0 0.0
        %302 = vmatprep.mubr.f32.mxu0 0.0
        %303 = vmatmul.mubr.f32.gmra.mxu0 %v236
        %v304 = vpop.f32.mrf.mxu0
        %v305 = vadd.f32 0.0, %v304
        %v306 = vpop.f32.mrf.mxu0
        %307 = vdwg.mxu0
        %v308 = vmax.f32 %v305, 0.0
        %vm309 = vcmask 15360
        %v311 = vsel %vm309, %v230, 0
        %v314 = vsel %vm309, %v231, 0
        %v317 = vsel %vm309, %v232, 0
        %v320 = vsel %vm309, %v233, 0
        %vm322 = vcmask 1041408
        %v324 = vsel %vm322, %v308, 0
        %326 = vmatprep.subr.mxu0 0.0
        %327 = vmatpush1.msra.mxu0 0.0
        %328 = vmatprep.subr.mxu0 0.0
        %329 = vmatpush1.msra.mxu0 0.0
        %330 = vmatprep.subr.mxu0 0.0
        %331 = vmatpush1.msra.mxu0 0.0
        %332 = vmatprep.subr.mxu0 0.0
        %333 = vmatpush1.msra.mxu0 0.0
        %334 = vmatprep.subr.mxu0 0.0
        %335 = vmatpush1.msra.mxu0 0.0
        %336 = vmatprep.subr.mxu0 0.0
        %337 = vmatpush1.msra.mxu0 0.0
        %338 = vmatprep.subr.mxu0 0.0
        %339 = vmatpush1.msra.mxu0 0.0
        %340 = vmatprep.subr.mxu0 0.0
        %341 = vmatpush1.msra.mxu0 0.0
        %342 = vmatprep.subr.mxu0 0.0
        %343 = vmatpush1.msra.mxu0 0.0
        %344 = vmatprep.subr.mxu0 0.0
        %345 = vmatpush1.msra.mxu0 0.0
        %346 = vmatprep.subr.mxu0 0.0
        %347 = vmatpush1.msra.mxu0 0.0
        %348 = vmatprep.subr.mxu0 0.0
        %349 = vmatpush1.msra.mxu0 0.0
        %350 = vmatprep.subr.mxu0 0.0
        %351 = vmatpush1.msra.mxu0 0.0
        %352 = vmatprep.subr.mxu0 0.0
        %353 = vmatpush1.msra.mxu0 0.0
        %354 = vmatprep.subr.mxu0 0.0
        %355 = vmatpush1.msra.mxu0 0.0
        %356 = vmatprep.subr.mxu0 0.0
        %357 = vmatpush1.msra.mxu0 %v324
        %358 = vmatprep.subr.mxu0 0.0
        %359 = vmatpush2.msra.mxu0 0.0
        %360 = vmatprep.subr.mxu0 0.0
        %361 = vmatpush2.msra.mxu0 0.0
        %362 = vmatprep.subr.mxu0 0.0
        %363 = vmatpush2.msra.mxu0 0.0
        %364 = vmatprep.subr.mxu0 0.0
        %365 = vmatpush2.msra.mxu0 0.0
        %366 = vmatprep.subr.mxu0 0.0
        %367 = vmatpush2.msra.mxu0 0.0
        %368 = vmatprep.subr.mxu0 0.0
        %369 = vmatpush2.msra.mxu0 0.0
        %370 = vmatprep.subr.mxu0 0.0
        %371 = vmatpush2.msra.mxu0 0.0
        %372 = vmatprep.subr.mxu0 0.0
        %373 = vmatpush2.msra.mxu0 0.0
        %374 = vmatprep.subr.mxu0 0.0
        %375 = vmatpush2.msra.mxu0 0.0
        %376 = vmatprep.subr.mxu0 0.0
        %377 = vmatpush2.msra.mxu0 0.0
        %378 = vmatprep.subr.mxu0 0.0
        %379 = vmatpush2.msra.mxu0 0.0
        %380 = vmatprep.subr.mxu0 0.0
        %381 = vmatpush2.msra.mxu0 0.0
        %382 = vmatprep.subr.mxu0 0.0
        %383 = vmatpush2.msra.mxu0 0.0
        %384 = vmatprep.subr.mxu0 0.0
        %385 = vmatpush2.msra.mxu0 0.0
        %386 = vmatprep.subr.mxu0 0.0
        %387 = vmatpush2.msra.mxu0 0.0
        %388 = vmatprep.subr.mxu0 0.0
        %389 = vmatpush2.msra.mxu0 0.0
        %390 = vmatprep.mubr.f32.mxu0 0.0
        %391 = vmatmul.mubr.f32.gmra.mxu0 %v311
        %v392 = vpop.f32.mrf.mxu0
        %v393 = vadd.f32 0.0, %v392
        %v394 = vpop.f32.mrf.mxu0
        %395 = vmatprep.mubr.f32.mxu0 0.0
        %396 = vmatmul.mubr.f32.gmra.mxu0 %v314
        %v397 = vpop.f32.mrf.mxu0
        %v398 = vadd.f32 0.0, %v397
        %v399 = vpop.f32.mrf.mxu0
        %400 = vmatprep.mubr.f32.mxu0 0.0
        %401 = vmatmul.mubr.f32.gmra.mxu0 %v317
        %v402 = vpop.f32.mrf.mxu0
        %v403 = vadd.f32 0.0, %v402
        %v404 = vpop.f32.mrf.mxu0
        %405 = vmatprep.mubr.f32.mxu0 0.0
        %406 = vmatmul.mubr.f32.gmra.mxu0 %v320
        %v407 = vpop.f32.mrf.mxu0
        %v408 = vadd.f32 0.0, %v407
        %v409 = vpop.f32.mrf.mxu0
        %410 = vdwg.mxu0
        %415 = vrot.lane.b32.xlu0 %v393, 127
        %v416 = vpop.permute.xlu0 %415
        %417 = vrot.lane.b32.xlu0 %v398, 127
        %v418 = vpop.permute.xlu0 %417
        %419 = vrot.lane.b32.xlu0 %v403, 127
        %v420 = vpop.permute.xlu0 %419
        %421 = vrot.lane.b32.xlu0 %v408, 127
        %v422 = vpop.permute.xlu0 %421
        %v427 = vadd.f32 %v393, %v416
        %v428 = vadd.f32 %v398, %v418
        %v429 = vadd.f32 %v403, %v420
        %v430 = vadd.f32 %v408, %v422
        %v431 = vxor.u32 %v427, 2147483648
        %v432 = vxor.u32 %v428, 2147483648
        %v433 = vxor.u32 %v429, 2147483648
        %v434 = vxor.u32 %v430, 2147483648
        %v435 = vmul.f32 %v431, 1.442695
        %v436 = vpow.pop %v435
        %v437 = vmul.f32 %v432, 1.442695
        %v438 = vpow.pop %v437
        %v439 = vmul.f32 %v433, 1.442695
        %v440 = vpow.pop %v439
        %v441 = vmul.f32 %v434, 1.442695
        %v442 = vpow.pop %v441
        %v443 = vadd.f32 %v436, 1.0
        %v444 = vadd.f32 %v438, 1.0
        %v445 = vadd.f32 %v440, 1.0
        %v446 = vadd.f32 %v442, 1.0
        %v447 = vrcp.pop %v443
        %v448 = vmul.f32 1.0, %v447
        %v449 = vrcp.pop %v444
        %v450 = vmul.f32 1.0, %v449
        %v451 = vrcp.pop %v445
        %v452 = vmul.f32 1.0, %v451
        %v453 = vrcp.pop %v446
        %v454 = vmul.f32 1.0, %v453
        %456 = vset.pattern.permute.xlu0 0
        %457 = vperm.xlu0 %456, %v448
        %v458 = vpop.permute.xlu0 %457
        %461 = vset.pattern.permute.xlu0 0
        %462 = vperm.xlu0 %461, %v450
        %v463 = vpop.permute.xlu0 %462
        %466 = vset.pattern.permute.xlu0 0
        %467 = vperm.xlu0 %466, %v452
        %v468 = vpop.permute.xlu0 %467
        %471 = vset.pattern.permute.xlu0 0
        %472 = vperm.xlu0 %471, %v454
        %v473 = vpop.permute.xlu0 %472
        %v475 = vmul.f32 %v189, %v458
        %v476 = vmul.f32 %v190, %v463
        %v477 = vmul.f32 %v191, %v468
        %v478 = vmul.f32 %v192, %v473
        %479 = vst.msk [vmem:[%s188] sm:$0xff] %vm193, %v475
        %480 = vst.msk [vmem:[%s188 + $0x8] sm:$0xff] %vm193, %v476
        %481 = vst.msk [vmem:[%s188 + $0x10] sm:$0xff] %vm193, %v477
        %482 = vst.msk [vmem:[%s188 + $0x18] sm:$0xff] %vm193, %v478
        %s483 = sand.u32 %s96, 1
        %s484 = scalar_lea.sflag [#allocation4], %s483
        %s485 = sand.u32 %s96, 1
        %s486 = smul.addr %s485, 32
        %s487 = scalar_lea.vmem [#allocation5], %s486
        // Predicated region
        $region37: #{tpu_custom_call.1} parent=31 // pred_check
          %p488 = pneg %p106
        $region38: #{tpu_custom_call.1} parent=31 // pred_check_branch
          %490 = sbr.rel (%p488) target = $region40
        $region39: #{tpu_custom_call.1} parent=31 // pred_region
          %s492 = ssub.s32 512, 512
          %493 = vsyncadd %s484, %s492
          %s494 = smul.addr %s20, 4
          %s495 = smul.addr %s494, 128
          %s496 = scalar_lea.hbm %s3, %s495
          %s497 = sshll.u32 %s487, 4
          %s498 = int_to_ptr.vmem [resolvable:$true] %s497
          %503 = dma.vmem_to_hbm [thread:$0]  %s498, 512, %s496, %s484, 128, 128, 8
        $region40: #{tpu_custom_call.1} parent=31 // pred_fallthru
          _
      $region32: #{tpu_custom_call.1} parent=5 // pred_fallthru
        _
      %p504 = scmp.le.s32.totalorder 2, %s15
      // Predicated region
      $region41: #{tpu_custom_call.1} parent=5 // pred_check
        %p505 = pneg %p504
      $region42: #{tpu_custom_call.1} parent=5 // pred_check_branch
        %507 = sbr.rel (%p505) target = $region44
      $region43: #{tpu_custom_call.1} parent=5 // pred_region
        %s508 = ssub.s32 %s15, 2
        // Predicated region
        $region45: #{tpu_custom_call.1} parent=43 // pred_check
          %p509 = pneg %p112
        $region46: #{tpu_custom_call.1} parent=43 // pred_check_branch
          %511 = sbr.rel (%p509) target = $region48
        $region47: #{tpu_custom_call.1} parent=43 // pred_region
          %s512 = sand.u32 %s97, 1
          %s513 = scalar_lea.sflag [#allocation4], %s512
          %s514 = sand.u32 %s97, 1
          %s515 = smul.addr %s514, 32
          %s516 = scalar_lea.vmem [#allocation5], %s515
          %517 = dma.done %s513, 512
        $region48: #{tpu_custom_call.1} parent=43 // pred_fallthru
          _
      $region44: #{tpu_custom_call.1} parent=5 // pred_fallthru
        _
    $region6: #{tpu_custom_call.1} parent=1 // loop_footer
      %s19 = sadd.s32 1, %s15
    $region7: #{tpu_custom_call.1} parent=1 // loop_footer_branch
      %14 = sbr.rel target = $region3
    $region8: #{tpu_custom_call.1} parent=1 // loop_exit
      _
    %518 = vsyncpa [#allocation3], 1
    %s519 = scalar_lea.sflag [#allocation3], 1
    %520 = vsyncpa %s519, 1
    %521 = vsyncpa [#allocation4], 1
    %s522 = scalar_lea.sflag [#allocation4], 1
    %523 = vsyncpa %s522, 1

</llo_original>
